<compile_context>
chip_gen: v6e
topology: v6e:2x2x1
jax: 0.10.0
libtpu: 0.0.40
codegen_flags: <defaults>
</compile_context>

<pallas_src>
import functools

import jax
import jax.numpy as jnp
from jax.experimental import pallas as pl
from jax.experimental.pallas import tpu as pltpu


def _vmem_capacity_bytes():
    """Per-TensorCore VMEM capacity; conservative fallback if query fails."""
    try:
        info = pltpu.get_tpu_info()
        cap = getattr(info, "vmem_capacity_bytes", None)
        if cap:
            return int(cap)
    except Exception:
        pass
    return 64 * 1024 * 1024  # v7x value (smallest across generations)


def _ce_sum_kernel(hw, tile_hw, n_inner, logits_ref, tgt_ref, out_ref, acc_ref):
    """Per-(batch, outer-slab) sum_i [logsumexp(logits[:, i]) - logits[t_i, i]].

    logits_ref: (1, C, TILE_HW) (any float dtype)   tgt_ref: (1, 1, TILE_HW) int
    out_ref:    (1, 1, 1) f32                       acc_ref: (1, TILE_HW) f32
    """
    o = pl.program_id(1)          # outer pixel-slab index (parallel)
    i = pl.program_id(2)          # inner pixel-tile index (reduction)

    @pl.when(i == 0)
    def _():
        acc_ref[...] = jnp.zeros_like(acc_ref)

    x = logits_ref[0].astype(jnp.float32)        # (C, TILE_HW) compute in f32
    t = tgt_ref[0].astype(jnp.int32)             # (1, TILE_HW)

    # numerically stable log-sum-exp over the class (sublane) axis
    m = jnp.max(x, axis=0, keepdims=True)        # (1, TILE_HW)
    lse = m + jnp.log(jnp.sum(jnp.exp(x - m), axis=0, keepdims=True))

    # "gather" logit at the target class: sum_c where(tgt == c, x[c], 0)
    row = jax.lax.broadcasted_iota(jnp.int32, x.shape, 0)       # (C, TILE_HW)
    logit_t = jnp.sum(jnp.where(row == t, x, 0.0), axis=0, keepdims=True)

    ce = lse - logit_t                           # (1, TILE_HW)

    # in-kernel tail mask from the UNclamped global tile index: global pixel
    # index < HW.  Uses where (not *) so OOB garbage in padded / duplicated
    # tail tiles cannot propagate NaNs into the sum.
    gt = o * n_inner + i                         # unclamped global tile index
    pix = gt * tile_hw + jax.lax.broadcasted_iota(jnp.int32, ce.shape, 1)
    acc_ref[...] += jnp.where(pix < hw, ce, 0.0)

    @pl.when(i == pl.num_programs(2) - 1)
    def _():
        out_ref[...] = jnp.sum(acc_ref[...]).reshape(1, 1, 1)


def _ce_sum_pallas(inp_nchw, target, *, tile_cap=512 * 1024):
    """inp: (B, C, H, W) float (f32/bf16), target: (B, H, W) int -> scalar CE sum."""
    B, C, H, W = inp_nchw.shape
    HW = H * W

    # free reshapes (contiguous); no transpose, no padding, no mask array,
    # and no dtype widening -- logits/targets stream at their native width.
    x3 = inp_nchw.reshape(B, C, HW)
    tgt = target
    if not jnp.issubdtype(tgt.dtype, jnp.integer):
        tgt = tgt.astype(jnp.int32)
    t3 = tgt.reshape(B, 1, HW)

    # ---- per-generation VMEM budget & tile sizing -------------------------
    vmem_cap = _vmem_capacity_bytes()                 # 64 MiB v7x, 128 MiB v5e/v6e
    budget = min(vmem_cap // 4, 24 * 1024 * 1024)     # 16 MiB v7x, 24 MiB v5e/v6e
    vmem_limit = int(min(vmem_cap // 2, 64 * 1024 * 1024))

    lsz = jnp.dtype(x3.dtype).itemsize
    tsz = jnp.dtype(t3.dtype).itemsize
    # all double-buffered streams + the f32 accumulator, per lane of TILE_HW
    bytes_per_lane = 2 * C * lsz + 2 * tsz + 4
    max_tile_from_vmem = max(128, (budget // bytes_per_lane) // 128 * 128)
    tile_hw = min(tile_cap, max_tile_from_vmem)
    if tile_hw >= HW:
        tile_hw = HW          # single full-extent block along the pixel axis
    n_tiles = -(-HW // tile_hw)

    # ---- 2-TensorCore balance (v7x): extra parallel axis for odd/small B --
    n_outer = 2 if (n_tiles >= 2 and B % 2 == 1) else 1
    n_inner = -(-n_tiles // n_outer)

    def pix_map(b, o, i):
        # clamp so a (possibly) padded last slab never issues a fully-OOB DMA;
        # the in-kernel mask (unclamped index) zeroes its contribution.
        return (b, 0, jnp.minimum(o * n_inner + i, n_tiles - 1))

    kernel = functools.partial(_ce_sum_kernel, HW, tile_hw, n_inner)

    partials = pl.pallas_call(
        kernel,
        out_shape=jax.ShapeDtypeStruct((B, n_outer, 1), jnp.float32),
        grid_spec=pltpu.PrefetchScalarGridSpec(
            num_scalar_prefetch=0,
            grid=(B, n_outer, n_inner),
            in_specs=[
                pl.BlockSpec((1, C, tile_hw), pix_map),
                pl.BlockSpec((1, 1, tile_hw), pix_map),
            ],
            out_specs=pl.BlockSpec((1, 1, 1), lambda b, o, i: (b, o, 0)),
            scratch_shapes=[pltpu.VMEM((1, tile_hw), jnp.float32)],
        ),
        compiler_params=pltpu.CompilerParams(
            # batch + outer pixel-slab axes parallel -> megacore split on v7x;
            # inner pixel-tile axis is the running reduction.
            dimension_semantics=("parallel", "parallel", "arbitrary"),
            vmem_limit_bytes=vmem_limit),
    )(x3, t3)
    # tiny final reduce over per-(batch, slab) partials in plain JAX
    return jnp.sum(partials)


@functools.partial(jax.jit, static_argnames=("gamma", "size_average"))
def focal_loss_2d(inp, target, weight=None, gamma=0.0, size_average=True):
    """JAX/Pallas equivalent of FocalLoss2d.forward.

    inp:    (B, C, H, W) float (f32 or bf16) logits (NCHW)
    target: (B, H, W)    int class indices (int8/int16/int32 all accepted)
    weight: unused (the PyTorch module never passes it to F.cross_entropy)
    """
    B, C, H, W = inp.shape
    N = B * H * W

    ce_sum = _ce_sum_pallas(inp, target)
    ce_mean = ce_sum / jnp.float32(N)      # cross_entropy reduction='mean'

    logpt = -ce_mean
    pt = jnp.exp(logpt)
    loss = -((1.0 - pt) ** gamma) * logpt
    # loss is scalar: mean() and sum() of a scalar are the scalar itself,
    # so size_average does not change the value (mirrors PyTorch semantics).
    return loss


def _reference(inp, target, gamma):
    B, C, H, W = inp.shape
    N = B * H * W
    logits = jnp.transpose(inp.reshape(B, C, H * W), (0, 2, 1)).reshape(N, C)
    logits = logits.astype(jnp.float32)
    tgt = target.reshape(N)
    logp = jax.nn.log_softmax(logits, axis=-1)
    ce = -jnp.take_along_axis(logp, tgt[:, None], axis=-1)[:, 0]
    logpt = -jnp.mean(ce)
    pt = jnp.exp(logpt)
    return -((1.0 - pt) ** gamma) * logpt


if __name__ == "__main__":
    key = jax.random.PRNGKey(0)
    k1, k2, _ = jax.random.split(key, 3)

    B, C, H, W = 2, 4, 16, 16
    x = jax.random.normal(k1, (B, C, H, W), dtype=jnp.float32)
    t = jax.random.randint(k2, (B, H, W), 0, C, dtype=jnp.int32)

    # Deterministic per-class weight (created but unused, like the module).
    class_weight = jnp.linspace(0.5, 1.5, C, dtype=jnp.float32)

    gamma = 2.0
    loss = focal_loss_2d(x, t, weight=class_weight, gamma=gamma,
                         size_average=True)
    loss = jax.block_until_ready(loss)

    ref = _reference(x, t, gamma)
    assert jnp.allclose(loss, ref, rtol=1e-5, atol=1e-5), (loss, ref)

    print("KERNEL_OK")
</pallas_src>

<mosaic_0001>
module attributes {stable_mosaic.version = 11 : i64} {
  func.func @_ce_sum_kernel(%arg0: i32, %arg1: i32, %arg2: i32, %arg3: memref<1x4x256xf32, #tpu.memory_space<vmem>>, %arg4: memref<1x1x256xi32, #tpu.memory_space<vmem>>, %arg5: memref<1x1x1xf32, #tpu.memory_space<vmem>>, %arg6: memref<1x256xf32, #tpu.memory_space<vmem>>) attributes {dimension_semantics = [#tpu.dimension_semantics<parallel>, #tpu.dimension_semantics<parallel>, #tpu.dimension_semantics<arbitrary>], iteration_bounds = array<i64: 2, 1, 1>, scalar_prefetch = 0 : i64, scratch_operands = 1 : i64, tpu.core_type = #tpu.core_type<tc>, window_params = [{transform_indices = @transform_0, window_bounds = array<i64: 1, 4, 256>}, {transform_indices = @transform_1, window_bounds = array<i64: 1, 1, 256>}, {transform_indices = @transform_2, window_bounds = array<i64: 1, 1, 1>}]} {
    %c0_i32 = arith.constant 0 : i32
    %0 = arith.cmpi eq, %arg2, %c0_i32 : i32
    %1 = arith.extui %0 : i1 to i32
    %c0_i32_0 = arith.constant 0 : i32
    %2 = arith.cmpi ne, %1, %c0_i32_0 : i32
    scf.if %2 {
      %cst_17 = arith.constant 0.000000e+00 : f32
      %40 = vector.broadcast %cst_17 : f32 to vector<1x256xf32>
      %c0_18 = arith.constant 0 : index
      %c0_19 = arith.constant 0 : index
      %41 = vector.load %arg6[%c0_18, %c0_19] : memref<1x256xf32, #tpu.memory_space<vmem>>, vector<1x256xf32>
      tpu.vector_store %arg6[%c0_18, %c0_19], %40 {strides = array<i32>} : memref<1x256xf32, #tpu.memory_space<vmem>>, vector<1x256xf32>,
    } else {
    }
    %c0 = arith.constant 0 : index
    %c0_1 = arith.constant 0 : index
    %c0_2 = arith.constant 0 : index
    %3 = vector.load %arg3[%c0, %c0_1, %c0_2] : memref<1x4x256xf32, #tpu.memory_space<vmem>>, vector<1x4x256xf32>
    %4 = vector.shape_cast %3 : vector<1x4x256xf32> to vector<4x256xf32>
    %c0_3 = arith.constant 0 : index
    %c0_4 = arith.constant 0 : index
    %c0_5 = arith.constant 0 : index
    %5 = vector.load %arg4[%c0_3, %c0_4, %c0_5] : memref<1x1x256xi32, #tpu.memory_space<vmem>>, vector<1x1x256xi32>
    %6 = vector.shape_cast %5 : vector<1x1x256xi32> to vector<1x256xi32>
    %cst = arith.constant dense<0xFF800000> : vector<256xf32>
    %7 = vector.multi_reduction <maximumf>, %4, %cst [0] : vector<4x256xf32> to vector<256xf32>
    %8 = vector.shape_cast %7 : vector<256xf32> to vector<1x256xf32>
    %9 = vector.broadcast %8 : vector<1x256xf32> to vector<4x256xf32>
    %10 = arith.subf %4, %9 : vector<4x256xf32>
    %11 = math.exp %10 : vector<4x256xf32>
    %cst_6 = arith.constant dense<0.000000e+00> : vector<256xf32>
    %12 = vector.multi_reduction <add>, %11, %cst_6 [0] : vector<4x256xf32> to vector<256xf32>
    %13 = vector.shape_cast %12 : vector<256xf32> to vector<1x256xf32>
    %14 = math.log %13 : vector<1x256xf32>
    %15 = arith.addf %8, %14 : vector<1x256xf32>
    %16 = tpu.iota {dimensions = array<i32: 0>} : vector<4x256xi32>
    %17 = vector.broadcast %6 : vector<1x256xi32> to vector<4x256xi32>
    %18 = arith.cmpi eq, %16, %17 : vector<4x256xi32>
    %cst_7 = arith.constant 0.000000e+00 : f32
    %19 = vector.broadcast %cst_7 : f32 to vector<4x256xf32>
    %20 = arith.select %18, %4, %19 : vector<4x256xi1>, vector<4x256xf32>
    %cst_8 = arith.constant dense<0.000000e+00> : vector<256xf32>
    %21 = vector.multi_reduction <add>, %20, %cst_8 [0] : vector<4x256xf32> to vector<256xf32>
    %22 = vector.shape_cast %21 : vector<256xf32> to vector<1x256xf32>
    %23 = arith.subf %15, %22 : vector<1x256xf32>
    %c1_i32 = arith.constant 1 : i32
    %24 = arith.muli %arg1, %c1_i32 : i32
    %25 = arith.addi %24, %arg2 : i32
    %c256_i32 = arith.constant 256 : i32
    %26 = arith.muli %25, %c256_i32 : i32
    %27 = tpu.iota {dimensions = array<i32: 1>} : vector<1x256xi32>
    %28 = vector.broadcast %26 : i32 to vector<1x256xi32>
    %29 = arith.addi %28, %27 : vector<1x256xi32>
    %c0_9 = arith.constant 0 : index
    %c0_10 = arith.constant 0 : index
    %30 = vector.load %arg6[%c0_9, %c0_10] : memref<1x256xf32, #tpu.memory_space<vmem>>, vector<1x256xf32>
    %c256_i32_11 = arith.constant 256 : i32
    %31 = vector.broadcast %c256_i32_11 : i32 to vector<1x256xi32>
    %32 = arith.cmpi slt, %29, %31 : vector<1x256xi32>
    %cst_12 = arith.constant 0.000000e+00 : f32
    %33 = vector.broadcast %cst_12 : f32 to vector<1x256xf32>
    %34 = arith.select %32, %23, %33 : vector<1x256xi1>, vector<1x256xf32>
    %35 = arith.addf %30, %34 : vector<1x256xf32>
    %c0_13 = arith.constant 0 : index
    %c0_14 = arith.constant 0 : index
    %36 = vector.load %arg6[%c0_13, %c0_14] : memref<1x256xf32, #tpu.memory_space<vmem>>, vector<1x256xf32>
    tpu.vector_store %arg6[%c0_13, %c0_14], %35 {strides = array<i32>} : memref<1x256xf32, #tpu.memory_space<vmem>>, vector<1x256xf32>,
    %c0_i32_15 = arith.constant 0 : i32
    %37 = arith.cmpi eq, %arg2, %c0_i32_15 : i32
    %38 = arith.extui %37 : i1 to i32
    %c0_i32_16 = arith.constant 0 : i32
    %39 = arith.cmpi ne, %38, %c0_i32_16 : i32
    scf.if %39 {
      %c0_17 = arith.constant 0 : index
      %c0_18 = arith.constant 0 : index
      %40 = vector.load %arg6[%c0_17, %c0_18] : memref<1x256xf32, #tpu.memory_space<vmem>>, vector<1x256xf32>
      %41 = vector.shape_cast %40 : vector<1x256xf32> to vector<1x1x256xf32>
      %cst_19 = arith.constant dense<0.000000e+00> : vector<1xf32>
      %42 = vector.multi_reduction <add>, %41, %cst_19 [1, 2] : vector<1x1x256xf32> to vector<1xf32>
      %43 = vector.shape_cast %42 : vector<1xf32> to vector<1x1x1xf32>
      %44 = vector.extract %43[0, 0, 0] : f32 from vector<1x1x1xf32>
      %45 = vector.broadcast %44 : f32 to vector<1x1x1xf32>
      %c0_20 = arith.constant 0 : index
      %c0_21 = arith.constant 0 : index
      %c0_22 = arith.constant 0 : index
      %46 = vector.load %arg5[%c0_20, %c0_21, %c0_22] : memref<1x1x1xf32, #tpu.memory_space<vmem>>, vector<1x1x1xf32>
      tpu.vector_store %arg5[%c0_20, %c0_21, %c0_22], %45 {strides = array<i32>} : memref<1x1x1xf32, #tpu.memory_space<vmem>>, vector<1x1x1xf32>,
    } else {
    }
    return
  }
  func.func @transform_0(%arg0: i32, %arg1: i32, %arg2: i32) -> (i32, i32, i32) {
    %c1_i32 = arith.constant 1 : i32
    %0 = arith.muli %arg1, %c1_i32 : i32
    %1 = arith.addi %0, %arg2 : i32
    %c0_i32 = arith.constant 0 : i32
    %2 = arith.minsi %1, %c0_i32 : i32
    %c0_i32_0 = arith.constant 0 : i32
    %c0_i32_1 = arith.constant 0 : i32
    return %arg0, %c0_i32_0, %2 : i32, i32, i32
  }
  func.func @transform_1(%arg0: i32, %arg1: i32, %arg2: i32) -> (i32, i32, i32) {
    %c1_i32 = arith.constant 1 : i32
    %0 = arith.muli %arg1, %c1_i32 : i32
    %1 = arith.addi %0, %arg2 : i32
    %c0_i32 = arith.constant 0 : i32
    %2 = arith.minsi %1, %c0_i32 : i32
    %c0_i32_0 = arith.constant 0 : i32
    %c0_i32_1 = arith.constant 0 : i32
    return %arg0, %c0_i32_0, %2 : i32, i32, i32
  }
  func.func @transform_2(%arg0: i32, %arg1: i32, %arg2: i32) -> (i32, i32, i32) {
    %c0_i32 = arith.constant 0 : i32
    %c0_i32_0 = arith.constant 0 : i32
    return %arg0, %arg1, %c0_i32 : i32, i32, i32
  }
}

</mosaic_0001>

<llo_original>
// kernel: focal_loss_2d.1
$region0: #{focal_loss_2d.1}
  #allocation0 [shape = 'u32[]', space=smem, size = 0x4, offset = 0x4, fixed_abs, tag = 'smem constant byte address 0x4 - core index']
  #allocation1 [shape = 'u32[144,128]{1,0:T(1,128)}', space=vmem, size = 0x12000, scoped, tag = 'internal scratch']
  #allocation2 [shape = 'f32[1,256]{1,0:T(1,128)}', space=vmem, size = 0x400, scoped, tag = 'scratch operand']
  %s0 = inlined_call_operand.vmem [shape: f32[2,4,256], index: 0, kind: input, shape index: {}]
  %s1 = inlined_call_operand.vmem [shape: s32[2,1,256], index: 1, kind: input, shape index: {}]
  %s2 = inlined_call_operand.vmem [shape: f32[2,1,1], index: 2, kind: output, shape index: {}]
  %s3 = sld [smem:[#allocation0]]
  $region49: #{focal_loss_2d.1} parent=0
    _
  %s5 = ssub.s32 1, %s3
  %s6 = scalar_select 0, %s5, %s3
  loop: start=0, step=1, limit=4
  $region2: #{focal_loss_2d.1} parent=0 // loop_pre_header
    _
  $region3: #{focal_loss_2d.1} parent=0 // loop_header
    %s8 = sphi 0, %s12
    %p9 = scmp.ge.s32.totalorder %s8, 4
    %s15 = sphi 0, %s34
    %s16 = sphi 0, %s30
    %s17 = sphi 0, %s26
    %s18 = sphi 0, %s15
    %s19 = sphi 0, %s16
    %s20 = sphi 0, %s17
    %s21 = sphi 0, %s18
    %s22 = sphi 0, %s19
    %s23 = sphi 0, %s20
    %s45 = sphi 0, %s47
    %s48 = sphi 0, %s45
    %s49 = sphi 0, %s48
    %s65 = sphi 0, %s49
    %s79 = sphi 0, %s81
    %s82 = sphi 0, %s79
    %s83 = sphi 0, %s82
    %s99 = sphi 0, %s83
    %s107 = sphi 0, %s109
    %s110 = sphi 0, %s107
    %s111 = sphi 0, %s110
    %s127 = sphi 0, %s111
  $region4: #{focal_loss_2d.1} parent=0 // loop_header_branch
    %11 = sbr.rel (%p9) target = $region8
  $region5: #{focal_loss_2d.1} parent=0 // loop_body
    %s13 = ssub.s32 %s8, 1
    %s14 = ssub.s32 %s8, 2
    %s24 = sadd.s32 1, %s17
    %p25 = scmp.ge.s32.totalorder %s24, 1
    %s26 = scalar_select %p25, 0, %s24
    %s27 = sadd.s32 1, %s16
    %s28 = scalar_select %p25, %s27, %s16
    %p29 = scmp.ge.s32.totalorder %s28, 1
    %s30 = scalar_select %p29, 0, %s28
    %s31 = sadd.s32 1, %s15
    %s32 = scalar_select %p29, %s31, %s15
    %p33 = scmp.ge.s32.totalorder %s32, 2
    %s34 = scalar_select %p33, 0, %s32
    %s35 = sadd.s32 %s16, %s17
    %p36 = scmp.lt.s32.totalorder %s35, 0
    %s37 = scalar_select %p36, %s35, 0
    %s38 = sadd.s32 %s30, %s26
    %p39 = scmp.lt.s32.totalorder %s38, 0
    %s40 = scalar_select %p39, %s38, 0
    %s41 = ssub.s32 %s15, %s34
    %s42 = ssub.s32 %s37, %s40
    %s43 = sor.u32 %s41, %s42
    %p44 = scmp.eq.s32.totalorder %s43, 0
    %s46 = sadd.s32 %s45, 1
    %s47 = scalar_select %p44, %s45, %s46
    %p50 = pneg %p44
    %p51 = scmp.eq.s32.totalorder %s8, 1
    %p52 = por %p50, %p51
    %p53 = scmp.ne.s32.totalorder %s45, %s48
    %p54 = scmp.eq.s32.totalorder %s8, 0
    %p55 = por %p53, %p54
    %p56 = scmp.ne.s32.totalorder %s45, %s48
    %p57 = scmp.eq.s32.totalorder %s13, 1
    %p58 = por %p56, %p57
    %p59 = scmp.ne.s32.totalorder %s48, %s49
    %p60 = scmp.eq.s32.totalorder %s13, 0
    %p61 = por %p59, %p60
    %p62 = scmp.ne.s32.totalorder %s48, %s49
    %p63 = scmp.eq.s32.totalorder %s14, 1
    %p64 = por %p62, %p63
    %p66 = scmp.ne.s32.totalorder %s49, %s65
    %p67 = scmp.eq.s32.totalorder %s14, 0
    %p68 = por %p66, %p67
    %s69 = sadd.s32 %s16, %s17
    %p70 = scmp.lt.s32.totalorder %s69, 0
    %s71 = scalar_select %p70, %s69, 0
    %s72 = sadd.s32 %s30, %s26
    %p73 = scmp.lt.s32.totalorder %s72, 0
    %s74 = scalar_select %p73, %s72, 0
    %s75 = ssub.s32 %s15, %s34
    %s76 = ssub.s32 %s71, %s74
    %s77 = sor.u32 %s75, %s76
    %p78 = scmp.eq.s32.totalorder %s77, 0
    %s80 = sadd.s32 %s79, 1
    %s81 = scalar_select %p78, %s79, %s80
    %p84 = pneg %p78
    %p85 = scmp.eq.s32.totalorder %s8, 1
    %p86 = por %p84, %p85
    %p87 = scmp.ne.s32.totalorder %s79, %s82
    %p88 = scmp.eq.s32.totalorder %s8, 0
    %p89 = por %p87, %p88
    %p90 = scmp.ne.s32.totalorder %s79, %s82
    %p91 = scmp.eq.s32.totalorder %s13, 1
    %p92 = por %p90, %p91
    %p93 = scmp.ne.s32.totalorder %s82, %s83
    %p94 = scmp.eq.s32.totalorder %s13, 0
    %p95 = por %p93, %p94
    %p96 = scmp.ne.s32.totalorder %s82, %s83
    %p97 = scmp.eq.s32.totalorder %s14, 1
    %p98 = por %p96, %p97
    %p100 = scmp.ne.s32.totalorder %s83, %s99
    %p101 = scmp.eq.s32.totalorder %s14, 0
    %p102 = por %p100, %p101
    %s103 = ssub.s32 %s15, %s34
    %s104 = ssub.s32 %s16, %s30
    %s105 = sor.u32 %s103, %s104
    %p106 = scmp.eq.s32.totalorder %s105, 0
    %s108 = sadd.s32 %s107, 1
    %s109 = scalar_select %p106, %s107, %s108
    %p112 = pneg %p106
    %p113 = scmp.eq.s32.totalorder %s8, 1
    %p114 = por %p112, %p113
    %p115 = scmp.ne.s32.totalorder %s107, %s110
    %p116 = scmp.eq.s32.totalorder %s8, 0
    %p117 = por %p115, %p116
    %p118 = scmp.ne.s32.totalorder %s107, %s110
    %p119 = scmp.eq.s32.totalorder %s13, 1
    %p120 = por %p118, %p119
    %p121 = scmp.ne.s32.totalorder %s110, %s111
    %p122 = scmp.eq.s32.totalorder %s13, 0
    %p123 = por %p121, %p122
    %p124 = scmp.ne.s32.totalorder %s110, %s111
    %p125 = scmp.eq.s32.totalorder %s14, 1
    %p126 = por %p124, %p125
    %p128 = scmp.ne.s32.totalorder %s111, %s127
    %p129 = scmp.eq.s32.totalorder %s14, 0
    %p130 = por %p128, %p129
    %p131 = scmp.le.s32.totalorder 1, %s8
    %p132 = scmp.lt.s32.totalorder %s8, 3
    %p133 = pnand %p131, %p132
    %p134 = pneg %p133
    // Predicated region
    $region9: #{focal_loss_2d.1} parent=5 // pred_check
      _
    $region10: #{focal_loss_2d.1} parent=5 // pred_check_branch
      %136 = sbr.rel (%p133) target = $region12
    $region11: #{focal_loss_2d.1} parent=5 // pred_region
      %s137 = ssub.s32 %s8, 1
    $region12: #{focal_loss_2d.1} parent=5 // pred_fallthru
      _
    %p138 = scmp.lt.s32.totalorder %s8, 2
    // Predicated region
    $region13: #{focal_loss_2d.1} parent=5 // pred_check
      %p139 = pneg %p138
    $region14: #{focal_loss_2d.1} parent=5 // pred_check_branch
      %141 = sbr.rel (%p139) target = $region16
    $region15: #{focal_loss_2d.1} parent=5 // pred_region
      // Predicated region
      $region17: #{focal_loss_2d.1} parent=15 // pred_check
        %p142 = pneg %p55
      $region18: #{focal_loss_2d.1} parent=15 // pred_check_branch
        %144 = sbr.rel (%p142) target = $region20
      $region19: #{focal_loss_2d.1} parent=15 // pred_region
        %s145 = sadd.s32 %s16, %s17
        %p146 = scmp.lt.s32.totalorder %s145, 0
        %s147 = scalar_select %p146, %s145, 0
        %s148 = smul.u32 2, %s147
        %p149 = scmp.lt.s32.totalorder %s15, 1
        %s150 = scalar_select %p149, %s15, 1
        %p151 = scmp.lt.s32.totalorder %s148, 1
        %s152 = scalar_select %p151, %s148, 1
        %s153 = smul.addr %s150, 2
        %s154 = sadd.s32 %s152, %s153
        %s155 = smul.addr %s154, 4
        %s156 = scalar_lea.vmem %s0, %s155
        %s157 = sadd.s32 %s16, %s17
        %p158 = scmp.lt.s32.totalorder %s157, 0
        %s159 = scalar_select %p158, %s157, 0
        %s160 = smul.u32 2, %s159
      $region20: #{focal_loss_2d.1} parent=15 // pred_fallthru
        _
      // Predicated region
      $region21: #{focal_loss_2d.1} parent=15 // pred_check
        %p161 = pneg %p89
      $region22: #{focal_loss_2d.1} parent=15 // pred_check_branch
        %163 = sbr.rel (%p161) target = $region24
      $region23: #{focal_loss_2d.1} parent=15 // pred_region
        %s164 = sadd.s32 %s16, %s17
        %p165 = scmp.lt.s32.totalorder %s164, 0
        %s166 = scalar_select %p165, %s164, 0
        %s167 = smul.u32 2, %s166
        %p168 = scmp.lt.s32.totalorder %s15, 1
        %s169 = scalar_select %p168, %s15, 1
        %p170 = scmp.lt.s32.totalorder %s167, 1
        %s171 = scalar_select %p170, %s167, 1
        %s172 = smul.addr %s169, 2
        %s173 = sadd.s32 %s171, %s172
        %s174 = scalar_lea.vmem %s1, %s173
        %s175 = sadd.s32 %s16, %s17
        %p176 = scmp.lt.s32.totalorder %s175, 0
        %s177 = scalar_select %p176, %s175, 0
        %s178 = smul.u32 2, %s177
      $region24: #{focal_loss_2d.1} parent=15 // pred_fallthru
        _
    $region16: #{focal_loss_2d.1} parent=5 // pred_fallthru
      _
    %p179 = scmp.le.s32.totalorder 1, %s8
    %p180 = scmp.lt.s32.totalorder %s8, 3
    %p181 = pnand %p179, %p180
    %p182 = pneg %p181
    // Predicated region
    $region25: #{focal_loss_2d.1} parent=5 // pred_check
      _
    $region26: #{focal_loss_2d.1} parent=5 // pred_check_branch
      %184 = sbr.rel (%p181) target = $region28
    $region27: #{focal_loss_2d.1} parent=5 // pred_region
      %s185 = ssub.s32 %s8, 1
      %s186 = sadd.s32 %s19, %s20
      %p187 = scmp.lt.s32.totalorder %s186, 0
      %s188 = scalar_select %p187, %s186, 0
      %s189 = smul.u32 2, %s188
      %p190 = scmp.lt.s32.totalorder %s18, 1
      %s191 = scalar_select %p190, %s18, 1
      %p192 = scmp.lt.s32.totalorder %s189, 1
      %s193 = scalar_select %p192, %s189, 1
      %s194 = smul.addr %s191, 2
      %s195 = sadd.s32 %s193, %s194
      %s196 = smul.addr %s195, 4
      %s197 = scalar_lea.vmem %s0, %s196
      %p198 = pneg %p61
      %p199 = pneg %p58
      %s200 = sadd.s32 %s19, %s20
      %p201 = scmp.lt.s32.totalorder %s200, 0
      %s202 = scalar_select %p201, %s200, 0
      %s203 = smul.u32 2, %s202
      %p204 = scmp.lt.s32.totalorder %s18, 1
      %s205 = scalar_select %p204, %s18, 1
      %p206 = scmp.lt.s32.totalorder %s203, 1
      %s207 = scalar_select %p206, %s203, 1
      %s208 = smul.addr %s205, 2
      %s209 = sadd.s32 %s207, %s208
      %s210 = scalar_lea.vmem %s1, %s209
      %p211 = pneg %p95
      %p212 = pneg %p92
      %p213 = pneg %p123
      %p214 = pneg %p120
      %p215 = scmp.lt.s32.totalorder %s18, 1
      %s216 = scalar_select %p215, %s18, 1
      %p217 = scmp.lt.s32.totalorder %s19, 0
      %s218 = scalar_select %p217, %s19, 0
      %s219 = sadd.s32 %s218, %s216
      %s220 = scalar_lea.vmem %s2, %s219
      %s221 = sadd.s32 %s19, %s20
      %p222 = scmp.lt.s32.totalorder %s221, 0
      %s223 = scalar_select %p222, %s221, 0
      %s224 = smul.u32 2, %s223
      %p225 = scmp.lt.s32.totalorder %s18, 1
      %s226 = scalar_select %p225, %s18, 1
      %p227 = scmp.lt.s32.totalorder %s224, 1
      %s228 = scalar_select %p227, %s224, 1
      %s229 = smul.addr %s226, 2
      %s230 = sadd.s32 %s228, %s229
      %s231 = smul.addr %s230, 4
      %s232 = scalar_lea.vmem %s0, %s231
      %s233 = sadd.s32 %s19, %s20
      %p234 = scmp.lt.s32.totalorder %s233, 0
      %s235 = scalar_select %p234, %s233, 0
      %s236 = smul.u32 2, %s235
      %s237 = sadd.s32 %s19, %s20
      %p238 = scmp.lt.s32.totalorder %s237, 0
      %s239 = scalar_select %p238, %s237, 0
      %s240 = smul.u32 2, %s239
      %p241 = scmp.lt.s32.totalorder %s18, 1
      %s242 = scalar_select %p241, %s18, 1
      %p243 = scmp.lt.s32.totalorder %s240, 1
      %s244 = scalar_select %p243, %s240, 1
      %s245 = smul.addr %s242, 2
      %s246 = sadd.s32 %s244, %s245
      %s247 = scalar_lea.vmem %s1, %s246
      %s248 = sadd.s32 %s19, %s20
      %p249 = scmp.lt.s32.totalorder %s248, 0
      %s250 = scalar_select %p249, %s248, 0
      %s251 = smul.u32 2, %s250
      %p252 = scmp.lt.s32.totalorder %s18, 1
      %s253 = scalar_select %p252, %s18, 1
      %p254 = scmp.lt.s32.totalorder %s19, 0
      %s255 = scalar_select %p254, %s19, 0
      %s256 = sadd.s32 %s255, %s253
      %s257 = scalar_lea.vmem %s2, %s256
      %p258 = scmp.eq.s32.totalorder %s20, 0
      // Predicated region
      $region29: #{focal_loss_2d.1} parent=27 // pred_check
        %p259 = pneg %p258
      $region30: #{focal_loss_2d.1} parent=27 // pred_check_branch
        %261 = sbr.rel (%p259) target = $region32
      $region31: #{focal_loss_2d.1} parent=27 // pred_region
        %v262 = vlaneseq
        %vm263 = vcmp.ge.s32.totalorder %v262, 0
        %vm264 = vcmp.lt.s32.totalorder %v262, 256
        %vm265 = vmand %vm263, %vm264
        %266 = vst.msk [vmem:[#allocation2] sm:$0x3] %vm265, 0.0
      $region32: #{focal_loss_2d.1} parent=27 // pred_fallthru
        _
      %v267 = vld [vmem:[%s232] sm:$0xff]
      %v268 = vld [vmem:[%s247] sm:$0x3]
      %v270 = vcombine.high %v267, %v267
      %vm272 = vcmask 1043456
      %v273 = vsel %vm272, %v267, -inf
      %v274 = vrot.slane %v273, 4
      %v275 = vmax.f32 %v273, %v274
      %v276 = vrot.slane %v275, 2
      %v277 = vmax.f32 %v275, %v276
      %v278 = vrot.slane %v277, 1
      %v279 = vmax.f32 %v277, %v278
      %v280 = vsel %vm272, %v270, -inf
      %v281 = vrot.slane %v280, 4
      %v282 = vmax.f32 %v280, %v281
      %v283 = vrot.slane %v282, 2
      %v284 = vmax.f32 %v282, %v283
      %v285 = vrot.slane %v284, 1
      %v286 = vmax.f32 %v284, %v285
      %v289 = vcombine.low %v279, %v286
      %v291 = vsub.f32 %v267, %v289
      %v292 = vmul.f32 %v291, 1.442695
      %v293 = vpow.pop %v292
      %v295 = vcombine.high %v293, %v293
      %v297 = vsel %vm272, %v293, 0.0
      %v298 = vrot.slane %v297, 4
      %v299 = vadd.f32 %v297, %v298
      %v300 = vrot.slane %v299, 2
      %v301 = vadd.f32 %v299, %v300
      %v302 = vrot.slane %v301, 1
      %v303 = vadd.f32 %v301, %v302
      %v304 = vsel %vm272, %v295, 0.0
      %v305 = vrot.slane %v304, 4
      %v306 = vadd.f32 %v304, %v305
      %v307 = vrot.slane %v306, 2
      %v308 = vadd.f32 %v306, %v307
      %v309 = vrot.slane %v308, 1
      %v310 = vadd.f32 %v308, %v309
      %v311 = vlog2.pop %v303
      %v312 = vmul.f32 %v311, 0.6931472
      %v313 = vlog2.pop %v310
      %v314 = vmul.f32 %v313, 0.6931472
      %v315 = vadd.f32 %v279, %v312
      %v316 = vadd.f32 %v286, %v314
      %v317 = vlaneseq
      %v318 = vshrl.u32 %v317, 7
      %v319 = vlaneseq
      %v320 = vshrl.u32 %v319, 7
      %v321 = vsub.s32 0, %v320
      %v322 = vrot.slane %v268, %v321
      %v323 = vlaneseq
      %v324 = vshrl.u32 %v323, 7
      %v325 = vsub.s32 1, %v324
      %v326 = vrot.slane %v268, %v325
      %vm327 = vcmp.eq.s32.totalorder %v318, %v322
      %vm328 = vcmp.eq.s32.totalorder %v318, %v326
      %v329 = vsel %vm327, %v267, 0.0
      %v330 = vsel %vm328, %v270, 0.0
      %v331 = vsel %vm272, %v329, 0.0
      %v332 = vrot.slane %v331, 4
      %v333 = vadd.f32 %v331, %v332
      %v334 = vrot.slane %v333, 2
      %v335 = vadd.f32 %v333, %v334
      %v336 = vrot.slane %v335, 1
      %v337 = vadd.f32 %v335, %v336
      %v338 = vsel %vm272, %v330, 0.0
      %v339 = vrot.slane %v338, 4
      %v340 = vadd.f32 %v338, %v339
      %v341 = vrot.slane %v340, 2
      %v342 = vadd.f32 %v340, %v341
      %v343 = vrot.slane %v342, 1
      %v344 = vadd.f32 %v342, %v343
      %v345 = vsub.f32 %v315, %v337
      %v346 = vsub.f32 %v316, %v344
      %s347 = sadd.s32 %s19, %s20
      %s348 = smul.u32 %s347, 256
      %v349 = vlaneseq
      %v350 = vand.u32 %v349, 127
      %v351 = vadd.s32 %v350, 128
      %v352 = vstv %s348
      %v353 = vadd.s32 %v352, %v350
      %v354 = vadd.s32 %v352, %v351
      %v355 = vld [vmem:[#allocation2] sm:$0x3]
      %vm356 = vcmp.lt.s32.totalorder %v353, 256
      %vm357 = vcmp.lt.s32.totalorder %v354, 256
      %v358 = vsel %vm356, %v345, 0.0
      %v359 = vsel %vm357, %v346, 0.0
      %v362 = vcombine.low %v358, %v359
      %v364 = vunpack.c.l.s4 1966171168
      %v365 = vunpack.c.0.s8 %v364
      %v366 = vlaneseq
      %v367 = vshrl.u32 %v366, 7
      %v368 = vsub.s32 %v365, %v367
      %v369 = vrot.slane %v362, %v368
      %v371 = vunpack.c.l.s4 1966171168
      %v372 = vunpack.c.0.s8 %v371
      %v373 = vlaneseq
      %v374 = vshrl.u32 %v373, 7
      %v375 = vsub.s32 %v372, %v374
      %v376 = vrot.slane %v369, %v375
      %v378 = vadd.f32 %v355, %v376
      %v379 = vlaneseq
      %vm380 = vcmp.ge.s32.totalorder %v379, 0
      %vm381 = vcmp.lt.s32.totalorder %v379, 256
      %vm382 = vmand %vm380, %vm381
      %383 = vst.msk [vmem:[#allocation2] sm:$0x3] %vm382, %v378
      // Predicated region
      $region33: #{focal_loss_2d.1} parent=27 // pred_check
        %p384 = pneg %p258
      $region34: #{focal_loss_2d.1} parent=27 // pred_check_branch
        %386 = sbr.rel (%p384) target = $region36
      $region35: #{focal_loss_2d.1} parent=27 // pred_region
        %v387 = vld [vmem:[#allocation2] sm:$0x3]
        %v389 = vlaneseq
        %v390 = vshrl.u32 %v389, 7
        %v391 = vsub.s32 0, %v390
        %v392 = vrot.slane %v387, %v391
        %v393 = vlaneseq
        %v394 = vshrl.u32 %v393, 7
        %v395 = vsub.s32 1, %v394
        %v396 = vrot.slane %v387, %v395
        %vm399 = vcmask 1040384
        %v400 = vsel %vm399, %v392, 0.0
        %v401 = vsel %vm399, %v396, 0.0
        %v402 = vadd.f32 %v400, %v401
        %403 = vadd.xlane.f32.xlu0 %v402
        %v404 = vpop.xlane.xlu0 %403
        %v405 = vrot.slane %v404, 4
        %v406 = vadd.f32 %v404, %v405
        %v407 = vrot.slane %v406, 2
        %v408 = vadd.f32 %v406, %v407
        %v409 = vrot.slane %v408, 1
        %v410 = vadd.f32 %v408, %v409
        %s411 = vtos %v410
        %v412 = vstv %s411
        %vm413 = vcmask 0
        %414 = vst.msk [vmem:[%s257] sm:$0x1] %vm413, %v412
      $region36: #{focal_loss_2d.1} parent=27 // pred_fallthru
        _
      %p415 = scmp.lt.s32.totalorder %s18, 1
      %s416 = scalar_select %p415, %s18, 1
      %p417 = scmp.lt.s32.totalorder %s19, 0
      %s418 = scalar_select %p417, %s19, 0
      %s419 = sadd.s32 %s418, %s416
      %s420 = scalar_lea.vmem %s2, %s419
      // Predicated region
      $region37: #{focal_loss_2d.1} parent=27 // pred_check
        %p421 = pneg %p120
      $region38: #{focal_loss_2d.1} parent=27 // pred_check_branch
        %423 = sbr.rel (%p421) target = $region40
      $region39: #{focal_loss_2d.1} parent=27 // pred_region
        _
      $region40: #{focal_loss_2d.1} parent=27 // pred_fallthru
        _
    $region28: #{focal_loss_2d.1} parent=5 // pred_fallthru
      _
    %p424 = scmp.le.s32.totalorder 2, %s8
    // Predicated region
    $region41: #{focal_loss_2d.1} parent=5 // pred_check
      %p425 = pneg %p424
    $region42: #{focal_loss_2d.1} parent=5 // pred_check_branch
      %427 = sbr.rel (%p425) target = $region44
    $region43: #{focal_loss_2d.1} parent=5 // pred_region
      %s428 = ssub.s32 %s8, 2
      // Predicated region
      $region45: #{focal_loss_2d.1} parent=43 // pred_check
        %p429 = pneg %p126
      $region46: #{focal_loss_2d.1} parent=43 // pred_check_branch
        %431 = sbr.rel (%p429) target = $region48
      $region47: #{focal_loss_2d.1} parent=43 // pred_region
        %p432 = scmp.lt.s32.totalorder %s21, 1
        %s433 = scalar_select %p432, %s21, 1
        %p434 = scmp.lt.s32.totalorder %s22, 0
        %s435 = scalar_select %p434, %s22, 0
        %s436 = sadd.s32 %s435, %s433
        %s437 = scalar_lea.vmem %s2, %s436
      $region48: #{focal_loss_2d.1} parent=43 // pred_fallthru
        _
    $region44: #{focal_loss_2d.1} parent=5 // pred_fallthru
      _
  $region6: #{focal_loss_2d.1} parent=0 // loop_footer
    %s12 = sadd.s32 1, %s8
  $region7: #{focal_loss_2d.1} parent=0 // loop_footer_branch
    %7 = sbr.rel target = $region3
  $region8: #{focal_loss_2d.1} parent=0 // loop_exit
    _

</llo_original>
